<compile_context>
chip_gen: v5e
topology: v5e:2x2
jax: 0.10.0
libtpu: 0.0.40
codegen_flags: <defaults>
</compile_context>

<pallas_src>
import jax
import jax.numpy as jnp
from jax.experimental import pallas as pl
from jax.experimental.pallas import tpu as pltpu


N_OUT = 5                          # nn.Linear(input_size, 5)
N_PAD = 8                          # padded output width (full-dim block => legal, tiny writes)
_VMEM_LIMIT_BYTES = 32 << 20       # explicit scoped-VMEM (v5e default is only 16 MiB)
_VMEM_WORKSET_BUDGET = 24 << 20    # per-step double-buffered working-set cap (safe on v7x 64 MiB)
_MAX_TB = 4096                     # keep DMAs reasonable / grid length >= a few steps


def _round_up(v, m):
    return ((v + m - 1) // m) * m


def _linear_kernel(x_ref, w_ref, b_ref, o_ref):
    # x_ref: [tb, K]      f32   (batch tile, pipelined per grid step)
    # w_ref: [K, N_PAD]   f32   (resident, pre-transposed/padded once in the wrapper)
    # b_ref: [1, N_PAD]   f32   (resident)
    # o_ref: [tb, N_PAD]  f32
    acc = jnp.dot(x_ref[...], w_ref[...], preferred_element_type=jnp.float32)
    o_ref[...] = acc + b_ref[...]


def prepare_params(weight, bias):
    """One-time parameter prep: pad outputs 5 -> N_PAD and transpose to [K, N_PAD]."""
    w = jnp.asarray(weight, jnp.float32)              # [N_OUT, K] (PyTorch layout)
    b = jnp.asarray(bias, jnp.float32)                # [N_OUT]
    n = w.shape[0]
    w_kn = jnp.pad(w, ((0, N_PAD - n), (0, 0))).T     # [K, N_PAD], zero rows are free
    b_1n = jnp.pad(b, (0, N_PAD - n)).reshape(1, N_PAD)
    return w_kn, b_1n


def _choose_batch_tile(B, K):
    # Per-step VMEM: double-buffered x tile + double-buffered out tile + resident w/b.
    bytes_per_row = 2 * (K + N_PAD) * 4
    fixed = (K * N_PAD + N_PAD) * 4
    cap = max(16, (_VMEM_WORKSET_BUDGET - fixed) // bytes_per_row)
    cap = max(16, (cap // 16) * 16)                   # multiple of 16 (sublane-safe)
    # Aim for ~8 grid steps on large B so the pipeline overlaps and the batch axis
    # can be sharded across both TensorCores on v7x.
    target = _round_up(pl.cdiv(B, 8), 16)
    return int(max(16, min(cap, target, _MAX_TB)))


def classifier_forward(x, w_kn, b_1n):
    """forward of ClassfierModule: y = x @ weight.T + bias, returns [B, 5] f32."""
    x = jnp.asarray(x, jnp.float32)
    B, K = x.shape

    tb = _choose_batch_tile(B, K)
    rows = _round_up(B, tb)
    if rows != B:
        x = jnp.pad(x, ((0, rows - B), (0, 0)))
    grid = (rows // tb,)

    flops = 2 * rows * K * N_PAD
    bytes_accessed = (rows * K * 4            # x read (f32, no wrapper cast)
                      + w_kn.size * 4 + b_1n.size * 4
                      + rows * N_PAD * 4)     # output write (8 cols, not 128)

    out = pl.pallas_call(
        _linear_kernel,
        out_shape=jax.ShapeDtypeStruct((rows, N_PAD), jnp.float32),
        grid_spec=pltpu.PrefetchScalarGridSpec(
            num_scalar_prefetch=0,
            grid=grid,
            in_specs=[
                pl.BlockSpec((tb, K), lambda i: (i, 0)),        # x tile, pipelined
                pl.BlockSpec((K, N_PAD), lambda i: (0, 0)),     # weight: full array, resident
                pl.BlockSpec((1, N_PAD), lambda i: (0, 0)),     # bias:   full array, resident
            ],
            out_specs=pl.BlockSpec((tb, N_PAD), lambda i: (i, 0)),
        ),
        compiler_params=pltpu.CompilerParams(
            dimension_semantics=("parallel",),   # shard batch across both TCs on v7x
            vmem_limit_bytes=_VMEM_LIMIT_BYTES,
        ),
        cost_estimate=pl.CostEstimate(
            flops=flops, transcendentals=0, bytes_accessed=bytes_accessed),
    )(x, w_kn, b_1n)

    # Strip batch padding and the 3 zero output lanes.
    return out[:B, :N_OUT]


if __name__ == "__main__":
    key = jax.random.PRNGKey(0)
    k_x, k_w, k_b = jax.random.split(key, 3)

    batch = 16
    input_size = 32

    # Deterministic PyTorch-style init: U(-1/sqrt(in), 1/sqrt(in))
    bound = 1.0 / (input_size ** 0.5)
    weight = jax.random.uniform(
        k_w, (N_OUT, input_size), jnp.float32, minval=-bound, maxval=bound)
    bias = jax.random.uniform(
        k_b, (N_OUT,), jnp.float32, minval=-bound, maxval=bound)
    x = jax.random.normal(k_x, (batch, input_size), jnp.float32)

    w_kn, b_1n = prepare_params(weight, bias)   # one-time param prep (hoisted out of call path)
    y = jax.block_until_ready(classifier_forward(x, w_kn, b_1n))

    y_ref = x @ weight.T + bias                 # full-f32 reference (kernel is f32 end-to-end)

    assert y.shape == (batch, N_OUT)
    assert jnp.allclose(y, y_ref, atol=1e-4, rtol=1e-4), float(jnp.max(jnp.abs(y - y_ref)))

    print("KERNEL_OK")
</pallas_src>

<mosaic_0001>
module attributes {stable_mosaic.version = 11 : i64} {
  func.func @_linear_kernel(%arg0: i32, %arg1: memref<16x32xf32, #tpu.memory_space<vmem>>, %arg2: memref<32x8xf32, #tpu.memory_space<vmem>>, %arg3: memref<1x8xf32, #tpu.memory_space<vmem>>, %arg4: memref<16x8xf32, #tpu.memory_space<vmem>>) attributes {dimension_semantics = [#tpu.dimension_semantics<parallel>], iteration_bounds = array<i64: 1>, scalar_prefetch = 0 : i64, scratch_operands = 0 : i64, tpu.core_type = #tpu.core_type<tc>, window_params = [{transform_indices = @transform_0, window_bounds = array<i64: 16, 32>}, {pipeline_mode = #tpu.pipeline_mode<synchronous>, transform_indices = @transform_1, window_bounds = array<i64: 32, 8>}, {pipeline_mode = #tpu.pipeline_mode<synchronous>, transform_indices = @transform_2, window_bounds = array<i64: 1, 8>}, {transform_indices = @transform_3, window_bounds = array<i64: 16, 8>}]} {
    %c0 = arith.constant 0 : index
    %c0_0 = arith.constant 0 : index
    %0 = vector.load %arg1[%c0, %c0_0] : memref<16x32xf32, #tpu.memory_space<vmem>>, vector<16x32xf32>
    %c0_1 = arith.constant 0 : index
    %c0_2 = arith.constant 0 : index
    %1 = vector.load %arg2[%c0_1, %c0_2] : memref<32x8xf32, #tpu.memory_space<vmem>>, vector<32x8xf32>
    %cst = arith.constant dense<0.000000e+00> : vector<16x8xf32>
    %2 = tpu.matmul %0, %1, %cst {dimension_numbers = #tpu.dot_dimension_numbers<[1], [0], [0], [1], [0, 0, 1, 1], [], []>} : vector<16x32xf32>, vector<32x8xf32>, vector<16x8xf32> -> vector<16x8xf32>
    %c0_3 = arith.constant 0 : index
    %c0_4 = arith.constant 0 : index
    %3 = vector.load %arg3[%c0_3, %c0_4] : memref<1x8xf32, #tpu.memory_space<vmem>>, vector<1x8xf32>
    %4 = vector.broadcast %3 : vector<1x8xf32> to vector<16x8xf32>
    %5 = arith.addf %2, %4 : vector<16x8xf32>
    %c0_5 = arith.constant 0 : index
    %c0_6 = arith.constant 0 : index
    %6 = vector.load %arg4[%c0_5, %c0_6] : memref<16x8xf32, #tpu.memory_space<vmem>>, vector<16x8xf32>
    tpu.vector_store %arg4[%c0_5, %c0_6], %5 {strides = array<i32>} : memref<16x8xf32, #tpu.memory_space<vmem>>, vector<16x8xf32>,
    return
  }
  func.func @transform_0(%arg0: i32) -> (i32, i32) {
    %c0_i32 = arith.constant 0 : i32
    %c0_i32_0 = arith.constant 0 : i32
    return %arg0, %c0_i32 : i32, i32
  }
  func.func @transform_1(%arg0: i32) -> (i32, i32) {
    %c0_i32 = arith.constant 0 : i32
    %c0_i32_0 = arith.constant 0 : i32
    %c0_i32_1 = arith.constant 0 : i32
    return %c0_i32, %c0_i32_0 : i32, i32
  }
  func.func @transform_2(%arg0: i32) -> (i32, i32) {
    %c0_i32 = arith.constant 0 : i32
    %c0_i32_0 = arith.constant 0 : i32
    %c0_i32_1 = arith.constant 0 : i32
    return %c0_i32, %c0_i32_0 : i32, i32
  }
  func.func @transform_3(%arg0: i32) -> (i32, i32) {
    %c0_i32 = arith.constant 0 : i32
    %c0_i32_0 = arith.constant 0 : i32
    return %arg0, %c0_i32 : i32, i32
  }
}

</mosaic_0001>

<llo_original>
// kernel: tpu_custom_call.1
$region0: #{tpu_custom_call.1}
  #allocation0 [shape = 'u32[]', space=smem, size = 0x4, offset = 0x4, fixed_abs, tag = 'smem constant byte address 0x4 - core index']
  #allocation1 [shape = 'u32[72,128]{1,0:T(1,128)}', space=vmem, size = 0x9000, scoped, tag = 'internal scratch']
  %s0 = inlined_call_operand.vmem [shape: f32[16,32], index: 0, kind: input, shape index: {}]
  %s1 = inlined_call_operand.vmem [shape: f32[32,8], index: 1, kind: input, shape index: {}]
  %s2 = inlined_call_operand.vmem [shape: f32[1,8], index: 2, kind: input, shape index: {}]
  %s3 = inlined_call_operand.vmem [shape: f32[16,8], index: 3, kind: output, shape index: {}]
  %s4 = sld [smem:[#allocation0]]
  $region22: #{tpu_custom_call.1} parent=0
    _
  %s6 = ssub.s32 1, %s4
  %s7 = scalar_select 0, %s6, %s4
  // Predicated region
  $region2: #{tpu_custom_call.1} parent=0 // pred_check
    _
  $region3: #{tpu_custom_call.1} parent=0 // pred_check_branch
    %9 = sbr.rel (0) target = $region5
  $region4: #{tpu_custom_call.1} parent=0 // pred_region
    _
  $region5: #{tpu_custom_call.1} parent=0 // pred_fallthru
    _
  // Predicated region
  $region6: #{tpu_custom_call.1} parent=0 // pred_check
    _
  $region7: #{tpu_custom_call.1} parent=0 // pred_check_branch
    %11 = sbr.rel (0) target = $region9
  $region8: #{tpu_custom_call.1} parent=0 // pred_region
    _
  $region9: #{tpu_custom_call.1} parent=0 // pred_fallthru
    _
  // Predicated region
  $region10: #{tpu_custom_call.1} parent=0 // pred_check
    _
  $region11: #{tpu_custom_call.1} parent=0 // pred_check_branch
    %13 = sbr.rel (0) target = $region13
  $region12: #{tpu_custom_call.1} parent=0 // pred_region
    _
  $region13: #{tpu_custom_call.1} parent=0 // pred_fallthru
    _
  %v14 = vld [vmem:[%s0] sm:$0xff]
  %v15 = vld [vmem:[%s0 + $0x8] sm:$0xff]
  %v16 = vld [vmem:[%s1] sm:$0xff]
  %v17 = vld [vmem:[%s1 + $0x8] sm:$0xff]
  %v18 = vld [vmem:[%s1 + $0x10] sm:$0xff]
  %v19 = vld [vmem:[%s1 + $0x18] sm:$0xff]
  %v20 = vld [vmem:[%s2] sm:$0x1]
  %v22 = vperm.slane %v20, 0
  %vm24 = vcmask 261120
  %v26 = vsel %vm24, %v14, 0
  %v29 = vsel %vm24, %v15, 0
  %31 = vmatpush.msra.mxu0 0.0
  %32 = vmatpush.msra.mxu0 0.0
  %33 = vmatpush.msra.mxu0 0.0
  %34 = vmatpush.msra.mxu0 0.0
  %35 = vmatpush.msra.mxu0 0.0
  %36 = vmatpush.msra.mxu0 0.0
  %37 = vmatpush.msra.mxu0 0.0
  %38 = vmatpush.msra.mxu0 0.0
  %39 = vmatpush.msra.mxu0 0.0
  %40 = vmatpush.msra.mxu0 0.0
  %41 = vmatpush.msra.mxu0 0.0
  %42 = vmatpush.msra.mxu0 0.0
  %43 = vmatpush.msra.mxu0 %v19
  %44 = vmatpush.msra.mxu0 %v18
  %45 = vmatpush.msra.mxu0 %v17
  %46 = vmatpush.msra.mxu0 %v16
  %47 = vmatmul.f32.gmra.mxu0 %v26
  %v48 = vpop.f32.mrf.mxu0
  %v49 = vadd.f32 %v22, %v48
  %50 = vmatmul.f32.gmra.mxu0 %v29
  %v51 = vpop.f32.mrf.mxu0
  %v52 = vadd.f32 %v22, %v51
  %53 = vdwg.mxu0
  %vm54 = vcmask 64512
  %55 = vst.msk [vmem:[%s3] sm:$0xff] %vm54, %v49
  %56 = vst.msk [vmem:[%s3 + $0x8] sm:$0xff] %vm54, %v52
  // Predicated region
  $region14: #{tpu_custom_call.1} parent=0 // pred_check
    _
  $region15: #{tpu_custom_call.1} parent=0 // pred_check_branch
    %58 = sbr.rel (0) target = $region17
  $region16: #{tpu_custom_call.1} parent=0 // pred_region
    _
  $region17: #{tpu_custom_call.1} parent=0 // pred_fallthru
    _
  // Predicated region
  $region18: #{tpu_custom_call.1} parent=0 // pred_check
    _
  $region19: #{tpu_custom_call.1} parent=0 // pred_check_branch
    %60 = sbr.rel (0) target = $region21
  $region20: #{tpu_custom_call.1} parent=0 // pred_region
    _
  $region21: #{tpu_custom_call.1} parent=0 // pred_fallthru
    _

</llo_original>
